<compile_context>
chip_gen: v5e
topology: v5e:2x2
jax: 0.10.0
libtpu: 0.0.40
codegen_flags: <defaults>
</compile_context>

<pallas_src>
import jax
import jax.numpy as jnp
from jax import lax
from jax.experimental import pallas as pl
from jax.experimental.pallas import tpu as pltpu


def _largest_divisor_leq(n, cap):
    for d in range(min(n, cap), 0, -1):
        if n % d == 0:
            return d
    return 1


def _round_up(x, m):
    return ((x + m - 1) // m) * m


def _vmem_limit_bytes():
    cap = None
    try:
        cap = getattr(pltpu.get_tpu_info(), "vmem_capacity_bytes", None)
    except Exception:
        cap = None
    if not cap:
        cap = 64 * 1024 * 1024  # conservative (v7x-sized) fallback
    # ~96 MiB on the 128 MiB-VMEM chips (v5e/v6e), ~48 MiB on 64 MiB v7x.
    return int(min(100 * 1024 * 1024, cap * 3 // 4))


# ----------------------------------------------------------------------------
# Fused Pallas kernel: whole causal-conv stack, one (batch-block, L-tile) step
# ----------------------------------------------------------------------------
def _make_fused_kernel(layer_meta, b_blk, l_tile, compute_dtype, mxu_k):
    """layer_meta: tuple of (k, d, pad, c_in, c_out, lead) per layer."""
    n_layers = len(layer_meta)
    stage_slot = {}
    for i, (_, _, pad, _, _, _) in enumerate(layer_meta):
        if pad > 0:
            stage_slot[i] = len(stage_slot)

    batched_dims = (((2,), (1,)), ((0,), (0,)))  # (b,o,k)@(b,k,l) -> (b,o,l)

    def kernel(*refs):
        x_ref = refs[0]
        w_refs = [refs[1 + 2 * i] for i in range(n_layers)]
        b_refs = [refs[2 + 2 * i] for i in range(n_layers)]
        o_ref = refs[1 + 2 * n_layers]
        stage_refs = list(refs[2 + 2 * n_layers:])

        j = pl.program_id(1)  # L-tile index (sequential along the sequence)

        # First L tile of each batch block: causal left-padding is all zeros.
        if stage_refs:
            @pl.when(j == 0)
            def _zero_stages():
                for s_ref in stage_refs:
                    s_ref[...] = jnp.zeros_like(s_ref)

        h = x_ref[...].astype(compute_dtype)          # (b_blk, C0, L_TILE)
        y = None
        for i, (k, d, pad, c_in, c_out, lead) in enumerate(layer_meta):
            w = w_refs[i][...]                        # (C_out, K*C_in) once/tile
            bias = b_refs[i][...]                     # (C_out, 1)       once/tile
            if pad > 0:
                stage = stage_refs[stage_slot[i]]
                # Lane-aligned (unmasked) store of the incoming tile; the causal
                # carry lives in lanes [lead-pad, lead).
                stage[:, :, lead:lead + l_tile] = h
                base = lead - pad

                def tap(t, _stage=stage, _base=base, _d=d):
                    return _stage[:, :, _base + t * _d: _base + t * _d + l_tile]

                if k * c_in <= mxu_k:
                    # Fold the K dilated taps into the contraction dim: one MXU
                    # pass per batch element for the whole layer.
                    stacked = jnp.concatenate([tap(t) for t in range(k)], axis=1)
                    wb = jnp.broadcast_to(w[None], (b_blk, c_out, k * c_in))
                    y = lax.dot_general(wb, stacked, batched_dims,
                                        preferred_element_type=jnp.float32)
                else:
                    # Fold would not save MXU passes -> tap-wise f32 accumulation
                    # (no sublane concat at all).
                    y = None
                    for t in range(k):
                        wt = w[:, t * c_in:(t + 1) * c_in]
                        wb = jnp.broadcast_to(wt[None], (b_blk, c_out, c_in))
                        part = lax.dot_general(wb, tap(t), batched_dims,
                                               preferred_element_type=jnp.float32)
                        y = part if y is None else y + part
                # Save this tile's causal halo for the next L tile.
                stage[:, :, base:lead] = stage[:, :, base + l_tile:lead + l_tile]
            else:  # kernel_size == 1 -> pointwise conv, no halo needed
                wb = jnp.broadcast_to(w[None], (b_blk, c_out, c_in))
                y = lax.dot_general(wb, h, batched_dims,
                                    preferred_element_type=jnp.float32)
            y = y + bias[None, :, :]                   # (1, C_out, 1) broadcast
            if i + 1 < n_layers:
                h = y.astype(compute_dtype)
        o_ref[...] = y.astype(o_ref.dtype)

    return kernel


# ----------------------------------------------------------------------------
# Wrapper: CausalConvNet forward (mode='dilation', requested_output=None)
# ----------------------------------------------------------------------------
def causal_conv_net_forward(x, layers, *, l_tile=1024, b_blk=None,
                            compute_dtype=jnp.bfloat16, out_dtype=None,
                            mxu_k=256):
    """x: (N, C0, L); layers: list of (weight (C_out, C_in, K), bias (C_out,), dilation)."""
    n, c0, seq_len = x.shape
    if out_dtype is None:
        out_dtype = x.dtype

    layer_meta = []
    params = []
    c_prev = c0
    total_mac = 0
    weight_bytes = 0
    for (w, b, d) in layers:
        c_out, c_in, k = w.shape
        if c_in != c_prev:
            raise ValueError("channel mismatch in causal_conv_list")
        pad = (k - 1) * int(d)
        lead = _round_up(pad, 128) if pad > 0 else 0   # 128-aligned tile offset
        layer_meta.append((int(k), int(d), pad, int(c_in), int(c_out), lead))
        # (C_out, C_in, K) -> (C_out, K*C_in): tap-major contraction axis so all
        # taps are covered by one MXU matmul (contraction index = t*C_in + c).
        w2d = jnp.transpose(w, (0, 2, 1)).reshape(c_out, k * c_in)
        params.append(w2d.astype(compute_dtype))
        params.append(b.reshape(c_out, 1).astype(jnp.float32))
        total_mac += c_out * k * c_in
        weight_bytes += (c_out * k * c_in) * jnp.dtype(compute_dtype).itemsize + c_out * 4
        c_prev = c_out
    c_last = c_prev

    # Lane-dense L tiles (always a multiple of 128); causal conv => right-padded
    # tail cannot affect the kept output columns.
    lt = min(_round_up(seq_len, 128), max(128, (l_tile // 128) * 128))
    l_padded = _round_up(seq_len, lt)
    n_l = l_padded // lt

    # Several batch elements per grid step to amortize per-step overhead, but
    # keep >= 2 batch blocks so both TensorCores get work on v7x.
    if b_blk is None:
        cap = min(8, max(1, n // 2))
        b_blk = _largest_divisor_leq(n, cap)
    if n % b_blk != 0:
        raise ValueError("b_blk must divide the batch size")
    n_b = n // b_blk

    x_in = x.astype(compute_dtype)
    if l_padded != seq_len:
        x_in = jnp.pad(x_in, ((0, 0), (0, 0), (0, l_padded - seq_len)))

    kernel = _make_fused_kernel(tuple(layer_meta), b_blk, lt, compute_dtype, mxu_k)

    in_specs = [pl.BlockSpec((b_blk, c0, lt), lambda ib, jl: (ib, 0, jl))]
    for (k, d, pad, c_in, c_out, lead) in layer_meta:
        in_specs.append(pl.BlockSpec((c_out, k * c_in), lambda ib, jl: (0, 0)))
        in_specs.append(pl.BlockSpec((c_out, 1), lambda ib, jl: (0, 0)))

    # Persistent staging scratch per layer: [carry (pad) | tile (lt)] with the
    # tile region starting at the 128-aligned lane offset `lead`.
    scratch_shapes = [
        pltpu.VMEM((b_blk, c_in, lead + lt), compute_dtype)
        for (k, d, pad, c_in, c_out, lead) in layer_meta
        if pad > 0
    ]

    cost = pl.CostEstimate(
        flops=2 * n * seq_len * total_mac,
        transcendentals=0,
        bytes_accessed=(n * c0 * l_padded * jnp.dtype(compute_dtype).itemsize
                        + n * c_last * l_padded * jnp.dtype(out_dtype).itemsize
                        + weight_bytes),
    )

    out = pl.pallas_call(
        kernel,
        out_shape=jax.ShapeDtypeStruct((n, c_last, l_padded), out_dtype),
        grid_spec=pltpu.PrefetchScalarGridSpec(
            num_scalar_prefetch=0,
            grid=(n_b, n_l),
            in_specs=in_specs,
            out_specs=pl.BlockSpec((b_blk, c_last, lt), lambda ib, jl: (ib, 0, jl)),
            scratch_shapes=scratch_shapes,
        ),
        compiler_params=pltpu.CompilerParams(
            # Batch axis shards across TensorCores; the L axis carries the causal
            # halo in scratch and MUST execute in order (keep it "arbitrary").
            dimension_semantics=("parallel", "arbitrary"),
            vmem_limit_bytes=_vmem_limit_bytes(),
        ),
        cost_estimate=cost,
    )(x_in, *params)

    if l_padded != seq_len:
        out = out[:, :, :seq_len]
    return out


# ----------------------------------------------------------------------------
# Pure-JAX reference (mirrors nn.ConstantPad1d + nn.Conv1d(dilation=subsampl))
# ----------------------------------------------------------------------------
def _ref_layer(x, w, b, d):
    k = w.shape[-1]
    pad = (k - 1) * d
    y = lax.conv_general_dilated(
        x, w, window_strides=(1,), padding=[(pad, 0)], rhs_dilation=(d,),
        dimension_numbers=("NCH", "OIH", "NCH"))
    return y + b.reshape(1, -1, 1)


def _ref_net(x, layers):
    h = x
    for (w, b, d) in layers:
        h = _ref_layer(h, w, b, d)
    return h


if __name__ == "__main__":
    key = jax.random.PRNGKey(0)

    def init_conv(kw, kb, c_out, c_in, k):
        bound = 1.0 / jnp.sqrt(jnp.float32(c_in * k))
        w = jax.random.uniform(kw, (c_out, c_in, k), jnp.float32, -bound, bound)
        b = jax.random.uniform(kb, (c_out,), jnp.float32, -bound, bound)
        return w, b

    # --- Test 1: batch=2, channels 4 -> 8 -> 4, L=16, kernel=3, dilations (1,2).
    #     Exercises the lane-dense padding path for short sequences (16 -> 128).
    N, L = 2, 16
    k_x, k_w1, k_b1, k_w2, k_b2 = jax.random.split(key, 5)
    x = jax.random.normal(k_x, (N, 4, L), dtype=jnp.float32)
    w1, b1 = init_conv(k_w1, k_b1, 8, 4, 3)   # CausalConv(4, 8, 3, subsampl=1)
    w2, b2 = init_conv(k_w2, k_b2, 4, 8, 3)   # CausalConv(8, 4, 3, subsampl=2)
    layers = [(w1, b1, 1), (w2, b2, 2)]

    ref = jax.block_until_ready(_ref_net(x, layers))

    # f32 compute path: exact check against the XLA conv reference.
    out_f32 = jax.block_until_ready(
        causal_conv_net_forward(x, layers, compute_dtype=jnp.float32))
    assert out_f32.shape == (N, 4, L), out_f32.shape
    assert jnp.allclose(out_f32, ref, atol=1e-5, rtol=1e-5), (
        float(jnp.max(jnp.abs(out_f32 - ref))))

    # bf16 MXU path (default): looser tolerance against the f32 reference.
    out_bf16 = jax.block_until_ready(
        causal_conv_net_forward(x, layers, compute_dtype=jnp.bfloat16))
    assert out_bf16.shape == (N, 4, L), out_bf16.shape
    assert jnp.allclose(out_bf16, ref, atol=1e-1, rtol=1e-1), (
        float(jnp.max(jnp.abs(out_bf16 - ref))))

    # --- Test 2: batch=4 (b_blk=2, two batch blocks), 3 layers with dilations
    #     (1, 2, 4), L=200 with 128-wide tiles: exercises the batched dot path,
    #     the cross-tile causal carry, and the ragged right-pad handling.
    N2, L2 = 4, 200
    k_x2, k_wa, k_ba, k_wb, k_bb, k_wc, k_bc = jax.random.split(
        jax.random.PRNGKey(1), 7)
    x2 = jax.random.normal(k_x2, (N2, 4, L2), dtype=jnp.float32)
    wa, ba = init_conv(k_wa, k_ba, 8, 4, 3)   # 4 -> 8, d=1
    wb, bb = init_conv(k_wb, k_bb, 8, 8, 3)   # 8 -> 8, d=2
    wc, bc = init_conv(k_wc, k_bc, 4, 8, 3)   # 8 -> 4, d=4
    layers2 = [(wa, ba, 1), (wb, bb, 2), (wc, bc, 4)]

    ref2 = jax.block_until_ready(_ref_net(x2, layers2))
    out2 = jax.block_until_ready(
        causal_conv_net_forward(x2, layers2, l_tile=128,
                                compute_dtype=jnp.float32))
    assert out2.shape == (N2, 4, L2), out2.shape
    assert jnp.allclose(out2, ref2, atol=1e-5, rtol=1e-5), (
        float(jnp.max(jnp.abs(out2 - ref2))))

    print("KERNEL_OK")
</pallas_src>

<mosaic_0001>
module attributes {stable_mosaic.version = 11 : i64} {
  func.func @kernel(%arg0: i32, %arg1: i32, %arg2: memref<1x4x128xf32, #tpu.memory_space<vmem>>, %arg3: memref<8x12xf32, #tpu.memory_space<vmem>>, %arg4: memref<8x1xf32, #tpu.memory_space<vmem>>, %arg5: memref<4x24xf32, #tpu.memory_space<vmem>>, %arg6: memref<4x1xf32, #tpu.memory_space<vmem>>, %arg7: memref<1x4x128xf32, #tpu.memory_space<vmem>>, %arg8: memref<1x4x256xf32, #tpu.memory_space<vmem>>, %arg9: memref<1x8x256xf32, #tpu.memory_space<vmem>>) attributes {dimension_semantics = [#tpu.dimension_semantics<parallel>, #tpu.dimension_semantics<arbitrary>], iteration_bounds = array<i64: 2, 1>, scalar_prefetch = 0 : i64, scratch_operands = 2 : i64, tpu.core_type = #tpu.core_type<tc>, window_params = [{transform_indices = @transform_0, window_bounds = array<i64: 1, 4, 128>}, {pipeline_mode = #tpu.pipeline_mode<synchronous>, transform_indices = @transform_1, window_bounds = array<i64: 8, 12>}, {pipeline_mode = #tpu.pipeline_mode<synchronous>, transform_indices = @transform_2, window_bounds = array<i64: 8, 1>}, {pipeline_mode = #tpu.pipeline_mode<synchronous>, transform_indices = @transform_3, window_bounds = array<i64: 4, 24>}, {pipeline_mode = #tpu.pipeline_mode<synchronous>, transform_indices = @transform_4, window_bounds = array<i64: 4, 1>}, {transform_indices = @transform_5, window_bounds = array<i64: 1, 4, 128>}]} {
    %c0_i32 = arith.constant 0 : i32
    %0 = arith.cmpi eq, %arg1, %c0_i32 : i32
    %1 = arith.extui %0 : i1 to i32
    %c0_i32_0 = arith.constant 0 : i32
    %2 = arith.cmpi ne, %1, %c0_i32_0 : i32
    scf.if %2 {
      %cst_45 = arith.constant 0.000000e+00 : f32
      %33 = vector.broadcast %cst_45 : f32 to vector<1x4x256xf32>
      %c0_46 = arith.constant 0 : index
      %c0_47 = arith.constant 0 : index
      %c0_48 = arith.constant 0 : index
      %34 = vector.load %arg8[%c0_46, %c0_47, %c0_48] : memref<1x4x256xf32, #tpu.memory_space<vmem>>, vector<1x4x256xf32>
      tpu.vector_store %arg8[%c0_46, %c0_47, %c0_48], %33 {strides = array<i32>} : memref<1x4x256xf32, #tpu.memory_space<vmem>>, vector<1x4x256xf32>,
      %cst_49 = arith.constant 0.000000e+00 : f32
      %35 = vector.broadcast %cst_49 : f32 to vector<1x8x256xf32>
      %c0_50 = arith.constant 0 : index
      %c0_51 = arith.constant 0 : index
      %c0_52 = arith.constant 0 : index
      %36 = vector.load %arg9[%c0_50, %c0_51, %c0_52] : memref<1x8x256xf32, #tpu.memory_space<vmem>>, vector<1x8x256xf32>
      tpu.vector_store %arg9[%c0_50, %c0_51, %c0_52], %35 {strides = array<i32>} : memref<1x8x256xf32, #tpu.memory_space<vmem>>, vector<1x8x256xf32>,
    } else {
    }
    %c0 = arith.constant 0 : index
    %c0_1 = arith.constant 0 : index
    %c0_2 = arith.constant 0 : index
    %3 = vector.load %arg2[%c0, %c0_1, %c0_2] : memref<1x4x128xf32, #tpu.memory_space<vmem>>, vector<1x4x128xf32>
    %c0_3 = arith.constant 0 : index
    %c0_4 = arith.constant 0 : index
    %4 = vector.load %arg3[%c0_3, %c0_4] : memref<8x12xf32, #tpu.memory_space<vmem>>, vector<8x12xf32>
    %c0_5 = arith.constant 0 : index
    %c0_6 = arith.constant 0 : index
    %5 = vector.load %arg4[%c0_5, %c0_6] : memref<8x1xf32, #tpu.memory_space<vmem>>, vector<8x1xf32>
    %c0_7 = arith.constant 0 : index
    %c0_8 = arith.constant 0 : index
    %c128 = arith.constant 128 : index
    %6 = vector.load %arg8[%c0_7, %c0_8, %c128] : memref<1x4x256xf32, #tpu.memory_space<vmem>>, vector<1x4x128xf32>
    tpu.vector_store %arg8[%c0_7, %c0_8, %c128], %3 {strides = array<i32>} : memref<1x4x256xf32, #tpu.memory_space<vmem>>, vector<1x4x128xf32>,
    %c0_9 = arith.constant 0 : index
    %c0_10 = arith.constant 0 : index
    %c126 = arith.constant 126 : index
    %7 = vector.load %arg8[%c0_9, %c0_10, %c126] : memref<1x4x256xf32, #tpu.memory_space<vmem>>, vector<1x4x128xf32>
    %c0_11 = arith.constant 0 : index
    %c0_12 = arith.constant 0 : index
    %c127 = arith.constant 127 : index
    %8 = vector.load %arg8[%c0_11, %c0_12, %c127] : memref<1x4x256xf32, #tpu.memory_space<vmem>>, vector<1x4x128xf32>
    %c0_13 = arith.constant 0 : index
    %c0_14 = arith.constant 0 : index
    %c128_15 = arith.constant 128 : index
    %9 = vector.load %arg8[%c0_13, %c0_14, %c128_15] : memref<1x4x256xf32, #tpu.memory_space<vmem>>, vector<1x4x128xf32>
    %10 = tpu.concatenate %7, %8, %9 in 1 : vector<1x4x128xf32>, vector<1x4x128xf32>, vector<1x4x128xf32> -> vector<1x12x128xf32>
    %11 = vector.shape_cast %4 : vector<8x12xf32> to vector<1x8x12xf32>
    %cst = arith.constant dense<0.000000e+00> : vector<1x8x128xf32>
    %12 = tpu.matmul %11, %10, %cst {dimension_numbers = #tpu.dot_dimension_numbers<[2], [1], [1], [2], [0, 0, 0, 1, 1, 2], [0], [0]>} : vector<1x8x12xf32>, vector<1x12x128xf32>, vector<1x8x128xf32> -> vector<1x8x128xf32>
    %c0_16 = arith.constant 0 : index
    %c0_17 = arith.constant 0 : index
    %c254 = arith.constant 254 : index
    %13 = vector.load %arg8[%c0_16, %c0_17, %c254] : memref<1x4x256xf32, #tpu.memory_space<vmem>>, vector<1x4x2xf32>
    %c0_18 = arith.constant 0 : index
    %c0_19 = arith.constant 0 : index
    %c126_20 = arith.constant 126 : index
    %14 = vector.load %arg8[%c0_18, %c0_19, %c126_20] : memref<1x4x256xf32, #tpu.memory_space<vmem>>, vector<1x4x2xf32>
    tpu.vector_store %arg8[%c0_18, %c0_19, %c126_20], %13 {strides = array<i32>} : memref<1x4x256xf32, #tpu.memory_space<vmem>>, vector<1x4x2xf32>,
    %15 = vector.shape_cast %5 : vector<8x1xf32> to vector<1x8x1xf32>
    %16 = vector.broadcast %15 : vector<1x8x1xf32> to vector<1x8x128xf32>
    %17 = arith.addf %12, %16 : vector<1x8x128xf32>
    %c0_21 = arith.constant 0 : index
    %c0_22 = arith.constant 0 : index
    %18 = vector.load %arg5[%c0_21, %c0_22] : memref<4x24xf32, #tpu.memory_space<vmem>>, vector<4x24xf32>
    %c0_23 = arith.constant 0 : index
    %c0_24 = arith.constant 0 : index
    %19 = vector.load %arg6[%c0_23, %c0_24] : memref<4x1xf32, #tpu.memory_space<vmem>>, vector<4x1xf32>
    %c0_25 = arith.constant 0 : index
    %c0_26 = arith.constant 0 : index
    %c128_27 = arith.constant 128 : index
    %20 = vector.load %arg9[%c0_25, %c0_26, %c128_27] : memref<1x8x256xf32, #tpu.memory_space<vmem>>, vector<1x8x128xf32>
    tpu.vector_store %arg9[%c0_25, %c0_26, %c128_27], %17 {strides = array<i32>} : memref<1x8x256xf32, #tpu.memory_space<vmem>>, vector<1x8x128xf32>,
    %c0_28 = arith.constant 0 : index
    %c0_29 = arith.constant 0 : index
    %c124 = arith.constant 124 : index
    %21 = vector.load %arg9[%c0_28, %c0_29, %c124] : memref<1x8x256xf32, #tpu.memory_space<vmem>>, vector<1x8x128xf32>
    %c0_30 = arith.constant 0 : index
    %c0_31 = arith.constant 0 : index
    %c126_32 = arith.constant 126 : index
    %22 = vector.load %arg9[%c0_30, %c0_31, %c126_32] : memref<1x8x256xf32, #tpu.memory_space<vmem>>, vector<1x8x128xf32>
    %c0_33 = arith.constant 0 : index
    %c0_34 = arith.constant 0 : index
    %c128_35 = arith.constant 128 : index
    %23 = vector.load %arg9[%c0_33, %c0_34, %c128_35] : memref<1x8x256xf32, #tpu.memory_space<vmem>>, vector<1x8x128xf32>
    %24 = tpu.concatenate %21, %22, %23 in 1 : vector<1x8x128xf32>, vector<1x8x128xf32>, vector<1x8x128xf32> -> vector<1x24x128xf32>
    %25 = vector.shape_cast %18 : vector<4x24xf32> to vector<1x4x24xf32>
    %cst_36 = arith.constant dense<0.000000e+00> : vector<1x4x128xf32>
    %26 = tpu.matmul %25, %24, %cst_36 {dimension_numbers = #tpu.dot_dimension_numbers<[2], [1], [1], [2], [0, 0, 0, 1, 1, 2], [0], [0]>} : vector<1x4x24xf32>, vector<1x24x128xf32>, vector<1x4x128xf32> -> vector<1x4x128xf32>
    %c0_37 = arith.constant 0 : index
    %c0_38 = arith.constant 0 : index
    %c252 = arith.constant 252 : index
    %27 = vector.load %arg9[%c0_37, %c0_38, %c252] : memref<1x8x256xf32, #tpu.memory_space<vmem>>, vector<1x8x4xf32>
    %c0_39 = arith.constant 0 : index
    %c0_40 = arith.constant 0 : index
    %c124_41 = arith.constant 124 : index
    %28 = vector.load %arg9[%c0_39, %c0_40, %c124_41] : memref<1x8x256xf32, #tpu.memory_space<vmem>>, vector<1x8x4xf32>
    tpu.vector_store %arg9[%c0_39, %c0_40, %c124_41], %27 {strides = array<i32>} : memref<1x8x256xf32, #tpu.memory_space<vmem>>, vector<1x8x4xf32>,
    %29 = vector.shape_cast %19 : vector<4x1xf32> to vector<1x4x1xf32>
    %30 = vector.broadcast %29 : vector<1x4x1xf32> to vector<1x4x128xf32>
    %31 = arith.addf %26, %30 : vector<1x4x128xf32>
    %c0_42 = arith.constant 0 : index
    %c0_43 = arith.constant 0 : index
    %c0_44 = arith.constant 0 : index
    %32 = vector.load %arg7[%c0_42, %c0_43, %c0_44] : memref<1x4x128xf32, #tpu.memory_space<vmem>>, vector<1x4x128xf32>
    tpu.vector_store %arg7[%c0_42, %c0_43, %c0_44], %31 {strides = array<i32>} : memref<1x4x128xf32, #tpu.memory_space<vmem>>, vector<1x4x128xf32>,
    return
  }
  func.func @transform_0(%arg0: i32, %arg1: i32) -> (i32, i32, i32) {
    %c0_i32 = arith.constant 0 : i32
    %c0_i32_0 = arith.constant 0 : i32
    return %arg0, %c0_i32, %arg1 : i32, i32, i32
  }
  func.func @transform_1(%arg0: i32, %arg1: i32) -> (i32, i32) {
    %c0_i32 = arith.constant 0 : i32
    %c0_i32_0 = arith.constant 0 : i32
    %c0_i32_1 = arith.constant 0 : i32
    return %c0_i32, %c0_i32_0 : i32, i32
  }
  func.func @transform_2(%arg0: i32, %arg1: i32) -> (i32, i32) {
    %c0_i32 = arith.constant 0 : i32
    %c0_i32_0 = arith.constant 0 : i32
    %c0_i32_1 = arith.constant 0 : i32
    return %c0_i32, %c0_i32_0 : i32, i32
  }
  func.func @transform_3(%arg0: i32, %arg1: i32) -> (i32, i32) {
    %c0_i32 = arith.constant 0 : i32
    %c0_i32_0 = arith.constant 0 : i32
    %c0_i32_1 = arith.constant 0 : i32
    return %c0_i32, %c0_i32_0 : i32, i32
  }
  func.func @transform_4(%arg0: i32, %arg1: i32) -> (i32, i32) {
    %c0_i32 = arith.constant 0 : i32
    %c0_i32_0 = arith.constant 0 : i32
    %c0_i32_1 = arith.constant 0 : i32
    return %c0_i32, %c0_i32_0 : i32, i32
  }
  func.func @transform_5(%arg0: i32, %arg1: i32) -> (i32, i32, i32) {
    %c0_i32 = arith.constant 0 : i32
    %c0_i32_0 = arith.constant 0 : i32
    return %arg0, %c0_i32, %arg1 : i32, i32, i32
  }
}

</mosaic_0001>

<llo_original>
// kernel: tpu_custom_call.1
$region0: #{tpu_custom_call.1}
  #allocation0 [shape = 'u32[]', space=smem, size = 0x4, offset = 0x4, fixed_abs, tag = 'smem constant byte address 0x4 - core index']
  #allocation1 [shape = 'u32[72,128]{1,0:T(1,128)}', space=vmem, size = 0x9000, scoped, tag = 'internal scratch']
  #allocation2 [shape = 'f32[1,4,256]{2,1,0:T(4,128)}', space=vmem, size = 0x1000, scoped, tag = 'scratch operand']
  #allocation3 [shape = 'f32[1,8,256]{2,1,0:T(8,128)}', space=vmem, size = 0x2000, scoped, tag = 'scratch operand']
  %s0 = inlined_call_operand.vmem [shape: f32[2,4,128], index: 0, kind: input, shape index: {}]
  %s1 = inlined_call_operand.hbm [shape: f32[8,12], index: 1, kind: input, shape index: {}]
  %s2 = inlined_call_operand.vmem [shape: f32[8,1], index: 2, kind: input, shape index: {}]
  %s3 = inlined_call_operand.vmem [shape: f32[4,24], index: 3, kind: input, shape index: {}]
  %s4 = inlined_call_operand.vmem [shape: f32[4,1], index: 4, kind: input, shape index: {}]
  %s5 = inlined_call_operand.hbm [shape: f32[2,4,128], index: 5, kind: output, shape index: {}]
  %s6 = sld [smem:[#allocation0]]
  $region61: #{tpu_custom_call.1} parent=0
    _
  %s8 = ssub.s32 1, %s6
  %s9 = scalar_select 0, %s8, %s6
  $region1: #{tpu_custom_call.1} parent=0
    #allocation4 [shape = 'u8[4096]{0}', space=vmem, size = 0x1000, scoped, tag = 'input window, operand 1, single buffered']
    #allocation5 [shape = 's32[2]{0}', space=sflag, size = 0x8, scoped, tag = 'scoped memory for tpu_custom_call.1']
    #allocation6 [shape = 's32[2]{0}', space=sflag, size = 0x8, scoped, tag = 'scoped memory for tpu_custom_call.1']
    #allocation7 [shape = 'u8[4096]{0}', space=vmem, size = 0x1000, scoped, tag = 'output window, operand 0']
    %10 = vsyncpa [#allocation5], 0
    %11 = vsyncpa [#allocation6], 0
    %s12 = scalar_lea.sflag [#allocation6], 1
    %13 = vsyncpa %s12, 0
    loop: start=0, step=1, limit=4
    $region2: #{tpu_custom_call.1} parent=1 // loop_pre_header
      _
    $region3: #{tpu_custom_call.1} parent=1 // loop_header
      %s15 = sphi 0, %s19
      %p16 = scmp.ge.s32.totalorder %s15, 4
      %s22 = sphi 0, %s34
      %s23 = sphi 0, %s30
      %s24 = sphi 0, %s22
      %s25 = sphi 0, %s23
      %s26 = sphi 0, %s24
      %s27 = sphi 0, %s25
      %s39 = sphi 0, %s41
      %s42 = sphi 0, %s39
      %s43 = sphi 0, %s42
      %s59 = sphi 0, %s43
      %s63 = sphi 0, %s63
      %s65 = sphi 0, %s63
      %s66 = sphi 0, %s65
      %s80 = sphi 0, %s66
      %s84 = sphi 0, %s84
      %s86 = sphi 0, %s84
      %s87 = sphi 0, %s86
      %s101 = sphi 0, %s87
      %s105 = sphi 0, %s105
      %s107 = sphi 0, %s105
      %s108 = sphi 0, %s107
      %s122 = sphi 0, %s108
      %s126 = sphi 0, %s126
      %s128 = sphi 0, %s126
      %s129 = sphi 0, %s128
      %s143 = sphi 0, %s129
      %s151 = sphi 0, %s153
      %s154 = sphi 0, %s151
      %s155 = sphi 0, %s154
      %s171 = sphi 0, %s155
    $region4: #{tpu_custom_call.1} parent=1 // loop_header_branch
      %18 = sbr.rel (%p16) target = $region8
    $region5: #{tpu_custom_call.1} parent=1 // loop_body
      %s20 = ssub.s32 %s15, 1
      %s21 = ssub.s32 %s15, 2
      %s28 = sadd.s32 1, %s23
      %p29 = scmp.ge.s32.totalorder %s28, 1
      %s30 = scalar_select %p29, 0, %s28
      %s31 = sadd.s32 1, %s22
      %s32 = scalar_select %p29, %s31, %s22
      %p33 = scmp.ge.s32.totalorder %s32, 2
      %s34 = scalar_select %p33, 0, %s32
      %s35 = ssub.s32 %s22, %s34
      %s36 = ssub.s32 %s23, %s30
      %s37 = sor.u32 %s35, %s36
      %p38 = scmp.eq.s32.totalorder %s37, 0
      %s40 = sadd.s32 %s39, 1
      %s41 = scalar_select %p38, %s39, %s40
      %p44 = pneg %p38
      %p45 = scmp.eq.s32.totalorder %s15, 1
      %p46 = por %p44, %p45
      %p47 = scmp.ne.s32.totalorder %s39, %s42
      %p48 = scmp.eq.s32.totalorder %s15, 0
      %p49 = por %p47, %p48
      %p50 = scmp.ne.s32.totalorder %s39, %s42
      %p51 = scmp.eq.s32.totalorder %s20, 1
      %p52 = por %p50, %p51
      %p53 = scmp.ne.s32.totalorder %s42, %s43
      %p54 = scmp.eq.s32.totalorder %s20, 0
      %p55 = por %p53, %p54
      %p56 = scmp.ne.s32.totalorder %s42, %s43
      %p57 = scmp.eq.s32.totalorder %s21, 1
      %p58 = por %p56, %p57
      %p60 = scmp.ne.s32.totalorder %s43, %s59
      %p61 = scmp.eq.s32.totalorder %s21, 0
      %p62 = por %p60, %p61
      %s64 = sadd.s32 %s63, 1
      %p67 = scmp.eq.s32.totalorder %s15, 1
      %p68 = scmp.ne.s32.totalorder %s63, %s65
      %p69 = scmp.eq.s32.totalorder %s15, 0
      %p70 = por %p68, %p69
      %p71 = scmp.ne.s32.totalorder %s63, %s65
      %p72 = scmp.eq.s32.totalorder %s20, 1
      %p73 = por %p71, %p72
      %p74 = scmp.ne.s32.totalorder %s65, %s66
      %p75 = scmp.eq.s32.totalorder %s20, 0
      %p76 = por %p74, %p75
      %p77 = scmp.ne.s32.totalorder %s65, %s66
      %p78 = scmp.eq.s32.totalorder %s21, 1
      %p79 = por %p77, %p78
      %p81 = scmp.ne.s32.totalorder %s66, %s80
      %p82 = scmp.eq.s32.totalorder %s21, 0
      %p83 = por %p81, %p82
      %s85 = sadd.s32 %s84, 1
      %p88 = scmp.eq.s32.totalorder %s15, 1
      %p89 = scmp.ne.s32.totalorder %s84, %s86
      %p90 = scmp.eq.s32.totalorder %s15, 0
      %p91 = por %p89, %p90
      %p92 = scmp.ne.s32.totalorder %s84, %s86
      %p93 = scmp.eq.s32.totalorder %s20, 1
      %p94 = por %p92, %p93
      %p95 = scmp.ne.s32.totalorder %s86, %s87
      %p96 = scmp.eq.s32.totalorder %s20, 0
      %p97 = por %p95, %p96
      %p98 = scmp.ne.s32.totalorder %s86, %s87
      %p99 = scmp.eq.s32.totalorder %s21, 1
      %p100 = por %p98, %p99
      %p102 = scmp.ne.s32.totalorder %s87, %s101
      %p103 = scmp.eq.s32.totalorder %s21, 0
      %p104 = por %p102, %p103
      %s106 = sadd.s32 %s105, 1
      %p109 = scmp.eq.s32.totalorder %s15, 1
      %p110 = scmp.ne.s32.totalorder %s105, %s107
      %p111 = scmp.eq.s32.totalorder %s15, 0
      %p112 = por %p110, %p111
      %p113 = scmp.ne.s32.totalorder %s105, %s107
      %p114 = scmp.eq.s32.totalorder %s20, 1
      %p115 = por %p113, %p114
      %p116 = scmp.ne.s32.totalorder %s107, %s108
      %p117 = scmp.eq.s32.totalorder %s20, 0
      %p118 = por %p116, %p117
      %p119 = scmp.ne.s32.totalorder %s107, %s108
      %p120 = scmp.eq.s32.totalorder %s21, 1
      %p121 = por %p119, %p120
      %p123 = scmp.ne.s32.totalorder %s108, %s122
      %p124 = scmp.eq.s32.totalorder %s21, 0
      %p125 = por %p123, %p124
      %s127 = sadd.s32 %s126, 1
      %p130 = scmp.eq.s32.totalorder %s15, 1
      %p131 = scmp.ne.s32.totalorder %s126, %s128
      %p132 = scmp.eq.s32.totalorder %s15, 0
      %p133 = por %p131, %p132
      %p134 = scmp.ne.s32.totalorder %s126, %s128
      %p135 = scmp.eq.s32.totalorder %s20, 1
      %p136 = por %p134, %p135
      %p137 = scmp.ne.s32.totalorder %s128, %s129
      %p138 = scmp.eq.s32.totalorder %s20, 0
      %p139 = por %p137, %p138
      %p140 = scmp.ne.s32.totalorder %s128, %s129
      %p141 = scmp.eq.s32.totalorder %s21, 1
      %p142 = por %p140, %p141
      %p144 = scmp.ne.s32.totalorder %s129, %s143
      %p145 = scmp.eq.s32.totalorder %s21, 0
      %p146 = por %p144, %p145
      %s147 = ssub.s32 %s22, %s34
      %s148 = ssub.s32 %s23, %s30
      %s149 = sor.u32 %s147, %s148
      %p150 = scmp.eq.s32.totalorder %s149, 0
      %s152 = sadd.s32 %s151, 1
      %s153 = scalar_select %p150, %s151, %s152
      %p156 = pneg %p150
      %p157 = scmp.eq.s32.totalorder %s15, 1
      %p158 = por %p156, %p157
      %p159 = scmp.ne.s32.totalorder %s151, %s154
      %p160 = scmp.eq.s32.totalorder %s15, 0
      %p161 = por %p159, %p160
      %p162 = scmp.ne.s32.totalorder %s151, %s154
      %p163 = scmp.eq.s32.totalorder %s20, 1
      %p164 = por %p162, %p163
      %p165 = scmp.ne.s32.totalorder %s154, %s155
      %p166 = scmp.eq.s32.totalorder %s20, 0
      %p167 = por %p165, %p166
      %p168 = scmp.ne.s32.totalorder %s154, %s155
      %p169 = scmp.eq.s32.totalorder %s21, 1
      %p170 = por %p168, %p169
      %p172 = scmp.ne.s32.totalorder %s155, %s171
      %p173 = scmp.eq.s32.totalorder %s21, 0
      %p174 = por %p172, %p173
      %p175 = scmp.le.s32.totalorder 1, %s15
      %p176 = scmp.lt.s32.totalorder %s15, 3
      %p177 = pnand %p175, %p176
      %p178 = pneg %p177
      // Predicated region
      $region9: #{tpu_custom_call.1} parent=5 // pred_check
        _
      $region10: #{tpu_custom_call.1} parent=5 // pred_check_branch
        %180 = sbr.rel (%p177) target = $region12
      $region11: #{tpu_custom_call.1} parent=5 // pred_region
        %s181 = ssub.s32 %s15, 1
        // Predicated region
        $region13: #{tpu_custom_call.1} parent=11 // pred_check
          %p182 = pneg %p76
        $region14: #{tpu_custom_call.1} parent=11 // pred_check_branch
          %184 = sbr.rel (%p182) target = $region16
        $region15: #{tpu_custom_call.1} parent=11 // pred_region
          %186 = vsyncadd [#allocation5], 0
          %s188 = sshll.u32 %s1, 4
          %s189 = int_to_ptr.hbm [resolvable:$true] %s188
          %s190 = sshll.u32 [#allocation4], 4
          %s191 = int_to_ptr.vmem [resolvable:$true] %s190
          %193 = dma.hbm_to_vmem [thread:$0]  %s189, 128, %s191, [#allocation5]
        $region16: #{tpu_custom_call.1} parent=11 // pred_fallthru
          _
        // Predicated region
        $region17: #{tpu_custom_call.1} parent=11 // pred_check
          %p194 = pneg %p97
        $region18: #{tpu_custom_call.1} parent=11 // pred_check_branch
          %196 = sbr.rel (%p194) target = $region20
        $region19: #{tpu_custom_call.1} parent=11 // pred_region
          _
        $region20: #{tpu_custom_call.1} parent=11 // pred_fallthru
          _
        // Predicated region
        $region21: #{tpu_custom_call.1} parent=11 // pred_check
          %p197 = pneg %p118
        $region22: #{tpu_custom_call.1} parent=11 // pred_check_branch
          %199 = sbr.rel (%p197) target = $region24
        $region23: #{tpu_custom_call.1} parent=11 // pred_region
          _
        $region24: #{tpu_custom_call.1} parent=11 // pred_fallthru
          _
        // Predicated region
        $region25: #{tpu_custom_call.1} parent=11 // pred_check
          %p200 = pneg %p139
        $region26: #{tpu_custom_call.1} parent=11 // pred_check_branch
          %202 = sbr.rel (%p200) target = $region28
        $region27: #{tpu_custom_call.1} parent=11 // pred_region
          _
        $region28: #{tpu_custom_call.1} parent=11 // pred_fallthru
          _
      $region12: #{tpu_custom_call.1} parent=5 // pred_fallthru
        _
      %p203 = scmp.lt.s32.totalorder %s15, 2
      // Predicated region
      $region29: #{tpu_custom_call.1} parent=5 // pred_check
        %p204 = pneg %p203
      $region30: #{tpu_custom_call.1} parent=5 // pred_check_branch
        %206 = sbr.rel (%p204) target = $region32
      $region31: #{tpu_custom_call.1} parent=5 // pred_region
        // Predicated region
        $region33: #{tpu_custom_call.1} parent=31 // pred_check
          %p207 = pneg %p49
        $region34: #{tpu_custom_call.1} parent=31 // pred_check_branch
          %209 = sbr.rel (%p207) target = $region36
        $region35: #{tpu_custom_call.1} parent=31 // pred_region
          %p210 = scmp.lt.s32.totalorder %s22, 1
          %s211 = scalar_select %p210, %s22, 1
          %p212 = scmp.lt.s32.totalorder %s23, 0
          %s213 = scalar_select %p212, %s23, 0
          %s214 = sadd.s32 %s213, %s211
          %s215 = smul.addr %s214, 4
          %s216 = scalar_lea.vmem %s0, %s215
        $region36: #{tpu_custom_call.1} parent=31 // pred_fallthru
          _
      $region32: #{tpu_custom_call.1} parent=5 // pred_fallthru
        _
      %p217 = scmp.le.s32.totalorder 1, %s15
      %p218 = scmp.lt.s32.totalorder %s15, 3
      %p219 = pnand %p217, %p218
      %p220 = pneg %p219
      // Predicated region
      $region37: #{tpu_custom_call.1} parent=5 // pred_check
        _
      $region38: #{tpu_custom_call.1} parent=5 // pred_check_branch
        %222 = sbr.rel (%p219) target = $region40
      $region39: #{tpu_custom_call.1} parent=5 // pred_region
        %s223 = ssub.s32 %s15, 1
        // Predicated region
        $region41: #{tpu_custom_call.1} parent=39 // pred_check
          %p224 = pneg %p76
        $region42: #{tpu_custom_call.1} parent=39 // pred_check_branch
          %226 = sbr.rel (%p224) target = $region44
        $region43: #{tpu_custom_call.1} parent=39 // pred_region
          %228 = dma.done [#allocation5], 128
        $region44: #{tpu_custom_call.1} parent=39 // pred_fallthru
          _
        %p229 = scmp.lt.s32.totalorder %s24, 1
        %s230 = scalar_select %p229, %s24, 1
        %p231 = scmp.lt.s32.totalorder %s25, 0
        %s232 = scalar_select %p231, %s25, 0
        %s233 = sadd.s32 %s232, %s230
        %s234 = smul.addr %s233, 4
        %s235 = scalar_lea.vmem %s0, %s234
        %p236 = pneg %p55
        %p237 = pneg %p52
        %p238 = pneg %p76
        %p239 = pneg %p73
        %p240 = pneg %p97
        %p241 = pneg %p94
        %p242 = pneg %p118
        %p243 = pneg %p115
        %p244 = pneg %p139
        %p245 = pneg %p136
        %p246 = pneg %p167
        %p247 = pneg %p164
        %s248 = sand.u32 %s154, 1
        %s249 = scalar_lea.sflag [#allocation6], %s248
        %s250 = sand.u32 %s154, 1
        %s251 = smul.addr %s250, 4
        %s252 = scalar_lea.vmem [#allocation7], %s251
        %p253 = scmp.lt.s32.totalorder %s24, 1
        %s254 = scalar_select %p253, %s24, 1
        %p255 = scmp.lt.s32.totalorder %s25, 0
        %s256 = scalar_select %p255, %s25, 0
        %s257 = sadd.s32 %s256, %s254
        %s258 = smul.addr %s257, 4
        %s259 = scalar_lea.vmem %s0, %s258
        %p260 = scmp.eq.s32.totalorder %s25, 0
        // Predicated region
        $region45: #{tpu_custom_call.1} parent=39 // pred_check
          %p261 = pneg %p260
        $region46: #{tpu_custom_call.1} parent=39 // pred_check_branch
          %263 = sbr.rel (%p261) target = $region48
        $region47: #{tpu_custom_call.1} parent=39 // pred_region
          %264 = vst [vmem:[#allocation2] sm:$0xff] 0.0
          %265 = vst [vmem:[#allocation3] sm:$0xff] 0.0
          %266 = vst [vmem:[#allocation3 + $0x8] sm:$0xff] 0.0
        $region48: #{tpu_custom_call.1} parent=39 // pred_fallthru
          _
        %v267 = vld [vmem:[%s259] sm:$0xf]
        %v268 = vld [vmem:[#allocation4] sm:$0xff]
        %v269 = vld [vmem:[%s2] sm:$0xff]
        %270 = vst [vmem:[#allocation2 + $0x4] sm:$0xf] %v267
        %v271 = vld [vmem:[#allocation2] sm:$0xff]
        %v272 = vld [vmem:[#allocation2 + $0x4] sm:$0xf]
        %274 = vst [vmem:[#allocation1] ss:$2 sm:$0xff] %v271
        %v275 = vld.sshfl [vmem:[#allocation1] sm:$0xff pattern:$0x75316420]
        %v276 = vld.sshfl [vmem:[#allocation1 + $0x8] sm:$0xff pattern:$0x75316420]
        %s279 = scalar_lea.vmem [#allocation1], 1
        %280 = vst [vmem:[%s279] ss:$2 sm:$0xff] %v271
        %v281 = vld.sshfl [vmem:[#allocation1] sm:$0xff pattern:$0x75316420]
        %v282 = vld.sshfl [vmem:[#allocation1 + $0x8] sm:$0xff pattern:$0x75316420]
        %283 = vrot.lane.b32.xlu0 %v281, 127
        %v284 = vpop.permute.xlu0 %283
        %285 = vrot.lane.b32.xlu0 %v282, 127
        %v286 = vpop.permute.xlu0 %285
        %vm287 = vcmask 1039360
        %v288 = vsel %vm287, %v284, %v286
        %292 = vst [vmem:[#allocation1] ss:$2 sm:$0xff] %v272
        %v293 = vld.sshfl [vmem:[#allocation1] sm:$0xff pattern:$0x75316420]
        %294 = vrot.lane.b32.xlu0 %v293, 126
        %v295 = vpop.permute.xlu0 %294
        %vm296 = vcmask 1043456
        %v297 = vsel %vm296, %v275, %v288
        %v298 = vsel %vm296, %v276, %v286
        %v299 = vld [vmem:[#allocation2 + $0x4] sm:$0xf]
        %vm300 = vcmask 1044464
        %301 = vst.msk [vmem:[#allocation2] sm:$0xf] %vm300, %v299
        %303 = vset.pattern.permute.xlu0 0
        %304 = vperm.xlu0 %303, %v269
        %v305 = vpop.permute.xlu0 %304
        %309 = vrot.lane.b32.xlu0 %v297, 2
        %v310 = vpop.permute.xlu0 %309
        %311 = vrot.lane.b32.xlu0 %v298, 2
        %v312 = vpop.permute.xlu0 %311
        %313 = vrot.lane.b32.xlu0 %v295, 2
        %v314 = vpop.permute.xlu0 %313
        %vm315 = vcmask 15360
        %v316 = vsel %vm315, %v310, %v312
        %vm318 = vcmask 97280
        %v320 = vsel %vm318, %v268, 0
        %v322 = vsel %vm296, %v314, 0
        %324 = vmatpush.msra.mxu0 0.0
        %325 = vmatpush.msra.mxu0 0.0
        %326 = vmatpush.msra.mxu0 0.0
        %327 = vmatpush.msra.mxu0 0.0
        %328 = vmatpush.msra.mxu0 0.0
        %329 = vmatpush.msra.mxu0 0.0
        %330 = vmatpush.msra.mxu0 0.0
        %331 = vmatpush.msra.mxu0 0.0
        %332 = vmatpush.msra.mxu0 0.0
        %333 = vmatpush.msra.mxu0 0.0
        %334 = vmatpush.msra.mxu0 0.0
        %335 = vmatpush.msra.mxu0 0.0
        %336 = vmatpush.msra.mxu0 0.0
        %337 = vmatpush.msra.mxu0 0.0
        %338 = vmatpush.msra.mxu0 %v322
        %339 = vmatpush.msra.mxu0 %v316
        %340 = vmatmul.f32.gmra.mxu0 %v320
        %v341 = vpop.f32.mrf.mxu0
        %v342 = vadd.f32 %v305, %v341
        %343 = vdwg.mxu0
        %v344 = vld [vmem:[%s3] sm:$0xf]
        %v345 = vld [vmem:[%s4] sm:$0xf]
        %346 = vst [vmem:[#allocation3 + $0x8] sm:$0xff] %v342
        %v347 = vld [vmem:[#allocation3] sm:$0xff]
        %v348 = vld [vmem:[#allocation3 + $0x8] sm:$0xff]
        %351 = vrot.lane.b32.xlu0 %v347, 126
        %v352 = vpop.permute.xlu0 %351
        %353 = vrot.lane.b32.xlu0 %v348, 126
        %v354 = vpop.permute.xlu0 %353
        %vm355 = vcmask 1031168
        %v356 = vsel %vm355, %v352, %v354
        %357 = vrot.lane.b32.xlu0 %v348, 124
        %v358 = vpop.permute.xlu0 %357
        %vm359 = vcmask 1048544
        %360 = vst.msk [vmem:[#allocation3] sm:$0xff] %vm359, %v348
        %362 = vset.pattern.permute.xlu0 0
        %363 = vperm.xlu0 %362, %v345
        %v364 = vpop.permute.xlu0 %363
        %366 = vrot.lane.b32.xlu0 %v347, 4
        %v367 = vpop.permute.xlu0 %366
        %368 = vrot.lane.b32.xlu0 %v348, 4
        %v369 = vpop.permute.xlu0 %368
        %370 = vrot.lane.b32.xlu0 %v356, 4
        %v371 = vpop.permute.xlu0 %370
        %372 = vrot.lane.b32.xlu0 %v354, 4
        %v373 = vpop.permute.xlu0 %372
        %374 = vrot.lane.b32.xlu0 %v358, 4
        %v375 = vpop.permute.xlu0 %374
        %vm376 = vcmask 31744
        %v377 = vsel %vm376, %v367, %v369
        %v378 = vsel %vm376, %v371, %v373
        %vm382 = vcmask 195584
        %v384 = vsel %vm382, %v344, 0
        %386 = vmatpush.msra.mxu0 0.0
        %387 = vmatpush.msra.mxu0 0.0
        %388 = vmatpush.msra.mxu0 0.0
        %389 = vmatpush.msra.mxu0 0.0
        %390 = vmatpush.msra.mxu0 0.0
        %391 = vmatpush.msra.mxu0 0.0
        %392 = vmatpush.msra.mxu0 0.0
        %393 = vmatpush.msra.mxu0 0.0
        %394 = vmatpush.msra.mxu0 0.0
        %395 = vmatpush.msra.mxu0 0.0
        %396 = vmatpush.msra.mxu0 0.0
        %397 = vmatpush.msra.mxu0 0.0
        %398 = vmatpush.msra.mxu0 0.0
        %399 = vmatpush.msra.mxu0 %v375
        %400 = vmatpush.msra.mxu0 %v378
        %401 = vmatpush.msra.mxu0 %v377
        %402 = vmatmul.f32.gmra.mxu0 %v384
        %v403 = vpop.f32.mrf.mxu0
        %v404 = vadd.f32 %v364, %v403
        %405 = vdwg.mxu0
        %406 = vst [vmem:[%s252] sm:$0xf] %v404
        %s407 = sand.u32 %s154, 1
        %s408 = scalar_lea.sflag [#allocation6], %s407
        %s409 = sand.u32 %s154, 1
        %s410 = smul.addr %s409, 4
        %s411 = scalar_lea.vmem [#allocation7], %s410
        // Predicated region
        $region49: #{tpu_custom_call.1} parent=39 // pred_check
          %p412 = pneg %p164
        $region50: #{tpu_custom_call.1} parent=39 // pred_check_branch
          %414 = sbr.rel (%p412) target = $region52
        $region51: #{tpu_custom_call.1} parent=39 // pred_region
          %416 = vsyncadd %s408, 0
          %s417 = sadd.s32 %s25, %s24
          %s418 = smul.addr %s417, 4
          %s419 = scalar_lea.hbm %s5, %s418
          %s421 = sshll.u32 %s411, 4
          %s422 = int_to_ptr.vmem [resolvable:$true] %s421
          %s423 = sshll.u32 %s419, 4
          %s424 = int_to_ptr.hbm [resolvable:$true] %s423
          %426 = dma.vmem_to_hbm [thread:$0]  %s422, 64, %s424, %s408
        $region52: #{tpu_custom_call.1} parent=39 // pred_fallthru
          _
      $region40: #{tpu_custom_call.1} parent=5 // pred_fallthru
        _
      %p427 = scmp.le.s32.totalorder 2, %s15
      // Predicated region
      $region53: #{tpu_custom_call.1} parent=5 // pred_check
        %p428 = pneg %p427
      $region54: #{tpu_custom_call.1} parent=5 // pred_check_branch
        %430 = sbr.rel (%p428) target = $region56
      $region55: #{tpu_custom_call.1} parent=5 // pred_region
        %s431 = ssub.s32 %s15, 2
        // Predicated region
        $region57: #{tpu_custom_call.1} parent=55 // pred_check
          %p432 = pneg %p170
        $region58: #{tpu_custom_call.1} parent=55 // pred_check_branch
          %434 = sbr.rel (%p432) target = $region60
        $region59: #{tpu_custom_call.1} parent=55 // pred_region
          %s435 = sand.u32 %s155, 1
          %s436 = scalar_lea.sflag [#allocation6], %s435
          %s437 = sand.u32 %s155, 1
          %s438 = smul.addr %s437, 4
          %s439 = scalar_lea.vmem [#allocation7], %s438
          %441 = dma.done %s436, 64
        $region60: #{tpu_custom_call.1} parent=55 // pred_fallthru
          _
      $region56: #{tpu_custom_call.1} parent=5 // pred_fallthru
        _
    $region6: #{tpu_custom_call.1} parent=1 // loop_footer
      %s19 = sadd.s32 1, %s15
    $region7: #{tpu_custom_call.1} parent=1 // loop_footer_branch
      %14 = sbr.rel target = $region3
    $region8: #{tpu_custom_call.1} parent=1 // loop_exit
      _
    %442 = vsyncpa [#allocation5], 1
    %s443 = scalar_lea.sflag [#allocation5], 1
    %444 = vsyncpa %s443, 1
    %445 = vsyncpa [#allocation6], 1
    %s446 = scalar_lea.sflag [#allocation6], 1
    %447 = vsyncpa %s446, 1

</llo_original>
